<compile_context>
chip_gen: v7x
topology: tpu7x:2x2x1
jax: 0.10.0
libtpu: 0.0.40
codegen_flags: <defaults>
</compile_context>

<pallas_src>
import functools

import jax
import jax.numpy as jnp
from jax import lax
from jax.experimental import pallas as pl
from jax.experimental.pallas import tpu as pltpu


def _mix_ce_kernel(*refs, n_heads, ignore_label):
    """refs = (pred_0..pred_{n-1}, tgt, out, acc_0..acc_n).

    pred_k : (1, C, TN)        logits tile (classes on sublanes, pixels on lanes)
    tgt    : (1, 1, TN) int32  labels tile
    out    : (1, n+1, 128) f32 per-batch partial sums (written on last tile)
    acc_k  : (1, TN) f32 VMEM  vector accumulators: n NLL sums + 1 valid count
    """
    pred_refs = refs[:n_heads]
    tgt_ref = refs[n_heads]
    out_ref = refs[n_heads + 1]
    acc_refs = refs[n_heads + 2:]

    j = pl.program_id(1)
    last_j = pl.num_programs(1) - 1

    # Reset the per-batch vector accumulators at the first pixel tile.
    @pl.when(j == 0)
    def _():
        for a in acc_refs:
            a[...] = jnp.zeros_like(a)

    tgt = tgt_ref[0]                                   # (1, TN) int32
    valid = tgt != jnp.int32(ignore_label)             # (1, TN) bool
    acc_refs[n_heads][...] += valid.astype(jnp.float32)

    for k in range(n_heads):
        logits = pred_refs[k][0].astype(jnp.float32)   # (C, TN), f32 after DMA
        # Numerically-stable log-softmax over the class (sublane) axis.
        m = jnp.max(logits, axis=0, keepdims=True)                        # (1, TN)
        shifted = logits - m
        lse = jnp.log(jnp.sum(jnp.exp(shifted), axis=0, keepdims=True))   # (1, TN)
        # Gather the shifted logit at the target class via a sublane one-hot.
        class_iota = lax.broadcasted_iota(jnp.int32, logits.shape, 0)     # (C, TN)
        onehot = class_iota == tgt                                        # (C, TN)
        shifted_t = jnp.sum(jnp.where(onehot, shifted, 0.0),
                            axis=0, keepdims=True)                        # (1, TN)
        nll = lse - shifted_t                                             # (1, TN)
        # Elementwise VPU add into the per-head vector accumulator.
        acc_refs[k][...] += jnp.where(valid, nll, 0.0)

    # Cross-lane reduction to scalars: once per batch, on the last tile only.
    @pl.when(j == last_j)
    def _():
        row_iota = lax.broadcasted_iota(jnp.int32, (n_heads + 1, 128), 0)
        out_tile = jnp.zeros((n_heads + 1, 128), jnp.float32)
        for k in range(n_heads + 1):
            total = jnp.sum(acc_refs[k][...])          # scalar (per batch)
            out_tile = jnp.where(row_iota == k, total, out_tile)
        out_ref[...] = out_tile[None]                  # (1, n+1, 128)


def _pick_pixel_tile(n_pixels, max_tile=8192):
    """Lane-aligned pixel tile; the pixel axis is padded up to a multiple of it."""
    lane_aligned = ((n_pixels + 127) // 128) * 128
    return lane_aligned if lane_aligned <= max_tile else max_tile


def mix_softmax_cross_entropy_loss(preds, target, *, aux=True, aux_weight=0.2,
                                   ignore_label=-1, max_pixel_tile=8192):
    """Fused forward of MixSoftmaxCrossEntropyLoss. Returns dict(loss=scalar)."""
    preds = tuple(preds)
    if aux:
        assert len(preds) == 2, "aux=True expects exactly two predictions"
        weights = (1.0, float(aux_weight))
    else:
        weights = (1.0,) * len(preds)
    n = len(preds)

    B, C, H, W = preds[0].shape
    N = H * W
    TN = _pick_pixel_tile(N, max_pixel_tile)
    n_tiles = -(-N // TN)              # ceil
    N_pad = n_tiles * TN

    # Layout plumbing: pixels -> lanes, classes -> sublanes.  Keep original
    # dtype (bf16 stays bf16 in HBM); padded pixels get ignore_label.
    preds_flat = []
    for p in preds:
        pf = p.reshape(B, C, N)
        if N_pad != N:
            pf = jnp.pad(pf, ((0, 0), (0, 0), (0, N_pad - N)))
        preds_flat.append(pf)
    tgt = target.reshape(B, 1, N).astype(jnp.int32)
    if N_pad != N:
        tgt = jnp.pad(tgt, ((0, 0), (0, 0), (0, N_pad - N)),
                      constant_values=int(ignore_label))

    kernel = functools.partial(_mix_ce_kernel, n_heads=n,
                               ignore_label=int(ignore_label))

    pred_specs = [pl.BlockSpec((1, C, TN), lambda b, j: (b, 0, j))
                  for _ in range(n)]
    tgt_spec = pl.BlockSpec((1, 1, TN), lambda b, j: (b, 0, j))
    out_spec = pl.BlockSpec((1, n + 1, 128), lambda b, j: (b, 0, 0))

    partials = pl.pallas_call(
        kernel,
        grid=(B, n_tiles),
        in_specs=pred_specs + [tgt_spec],
        out_specs=out_spec,
        out_shape=jax.ShapeDtypeStruct((B, n + 1, 128), jnp.float32),
        scratch_shapes=[pltpu.VMEM((1, TN), jnp.float32) for _ in range(n + 1)],
        compiler_params=pltpu.CompilerParams(
            # batch axis -> megacore-parallel (v7x); pixel-tile axis carries
            # the per-batch accumulators -> sequential.
            dimension_semantics=("parallel", "arbitrary"),
            vmem_limit_bytes=32 * 1024 * 1024),
    )(*preds_flat, tgt)

    per_batch = partials[:, :, 0]                        # (B, n+1)
    head_sums = jnp.sum(per_batch[:, :n], axis=0)        # (n,)  NLL sums per head
    valid_count = jnp.sum(per_batch[:, n])               # total non-ignored pixels
    total = jnp.sum(jnp.asarray(weights, jnp.float32) * head_sums)
    # NOTE: matches PyTorch — if every pixel is ignored this is 0/0 = NaN.
    loss = total / valid_count
    return {"loss": loss}


def _reference_loss(preds, target, aux=True, aux_weight=0.2, ignore_label=-1):
    """Pure-JAX mirror of the PyTorch forward (for correctness check)."""
    def ce(pred, label):
        logp = jax.nn.log_softmax(pred.astype(jnp.float32), axis=1)   # (B,C,H,W)
        valid = label != ignore_label
        safe = jnp.where(valid, label, 0)
        logp_t = jnp.take_along_axis(logp, safe[:, None], axis=1)[:, 0]
        per = jnp.where(valid, -logp_t, 0.0)
        return jnp.sum(per) / jnp.sum(valid.astype(jnp.float32))

    if aux:
        return ce(preds[0], target) + aux_weight * ce(preds[1], target)
    total = ce(preds[0], target)
    for p in preds[1:]:
        total = total + ce(p, target)
    return total


if __name__ == "__main__":
    B, C, H, W = 2, 4, 16, 16
    aux_weight = 0.2
    ignore_label = -1

    key = jax.random.PRNGKey(0)
    k1, k2, k3, k4 = jax.random.split(key, 4)

    pred1 = jax.random.normal(k1, (B, C, H, W), dtype=jnp.float32)
    pred2 = jax.random.normal(k2, (B, C, H, W), dtype=jnp.float32)
    labels = jax.random.randint(k3, (B, H, W), 0, C, dtype=jnp.int32)
    is_ignored = jax.random.uniform(k4, (B, H, W)) < 0.15
    target = jnp.where(is_ignored, ignore_label, labels).astype(jnp.int32)

    out = mix_softmax_cross_entropy_loss((pred1, pred2), target, aux=True,
                                         aux_weight=aux_weight,
                                         ignore_label=ignore_label)
    loss = out["loss"]
    jax.block_until_ready(loss)

    ref = _reference_loss((pred1, pred2), target, aux=True,
                          aux_weight=aux_weight, ignore_label=ignore_label)
    assert jnp.allclose(loss, ref, rtol=1e-5, atol=1e-5), (loss, ref)

    print("KERNEL_OK")
</pallas_src>

<mosaic_0001>
module attributes {stable_mosaic.version = 11 : i64} {
  func.func @_mix_ce_kernel(%arg0: i32, %arg1: i32, %arg2: memref<1x4x256xf32, #tpu.memory_space<vmem>>, %arg3: memref<1x4x256xf32, #tpu.memory_space<vmem>>, %arg4: memref<1x1x256xi32, #tpu.memory_space<vmem>>, %arg5: memref<1x3x128xf32, #tpu.memory_space<vmem>>, %arg6: memref<1x256xf32, #tpu.memory_space<vmem>>, %arg7: memref<1x256xf32, #tpu.memory_space<vmem>>, %arg8: memref<1x256xf32, #tpu.memory_space<vmem>>) attributes {dimension_semantics = [#tpu.dimension_semantics<parallel>, #tpu.dimension_semantics<arbitrary>], iteration_bounds = array<i64: 2, 1>, scalar_prefetch = 0 : i64, scratch_operands = 3 : i64, tpu.core_type = #tpu.core_type<tc>, window_params = [{transform_indices = @transform_0, window_bounds = array<i64: 1, 4, 256>}, {transform_indices = @transform_1, window_bounds = array<i64: 1, 4, 256>}, {transform_indices = @transform_2, window_bounds = array<i64: 1, 1, 256>}, {transform_indices = @transform_3, window_bounds = array<i64: 1, 3, 128>}]} {
    %c0_i32 = arith.constant 0 : i32
    %0 = arith.cmpi eq, %arg1, %c0_i32 : i32
    %1 = arith.extui %0 : i1 to i32
    %c0_i32_0 = arith.constant 0 : i32
    %2 = arith.cmpi ne, %1, %c0_i32_0 : i32
    scf.if %2 {
      %cst_32 = arith.constant 0.000000e+00 : f32
      %61 = vector.broadcast %cst_32 : f32 to vector<1x256xf32>
      %c0_33 = arith.constant 0 : index
      %c0_34 = arith.constant 0 : index
      %62 = vector.load %arg6[%c0_33, %c0_34] : memref<1x256xf32, #tpu.memory_space<vmem>>, vector<1x256xf32>
      tpu.vector_store %arg6[%c0_33, %c0_34], %61 {strides = array<i32>} : memref<1x256xf32, #tpu.memory_space<vmem>>, vector<1x256xf32>,
      %cst_35 = arith.constant 0.000000e+00 : f32
      %63 = vector.broadcast %cst_35 : f32 to vector<1x256xf32>
      %c0_36 = arith.constant 0 : index
      %c0_37 = arith.constant 0 : index
      %64 = vector.load %arg7[%c0_36, %c0_37] : memref<1x256xf32, #tpu.memory_space<vmem>>, vector<1x256xf32>
      tpu.vector_store %arg7[%c0_36, %c0_37], %63 {strides = array<i32>} : memref<1x256xf32, #tpu.memory_space<vmem>>, vector<1x256xf32>,
      %cst_38 = arith.constant 0.000000e+00 : f32
      %65 = vector.broadcast %cst_38 : f32 to vector<1x256xf32>
      %c0_39 = arith.constant 0 : index
      %c0_40 = arith.constant 0 : index
      %66 = vector.load %arg8[%c0_39, %c0_40] : memref<1x256xf32, #tpu.memory_space<vmem>>, vector<1x256xf32>
      tpu.vector_store %arg8[%c0_39, %c0_40], %65 {strides = array<i32>} : memref<1x256xf32, #tpu.memory_space<vmem>>, vector<1x256xf32>,
    } else {
    }
    %c0 = arith.constant 0 : index
    %c0_1 = arith.constant 0 : index
    %c0_2 = arith.constant 0 : index
    %3 = vector.load %arg4[%c0, %c0_1, %c0_2] : memref<1x1x256xi32, #tpu.memory_space<vmem>>, vector<1x1x256xi32>
    %4 = vector.shape_cast %3 : vector<1x1x256xi32> to vector<1x256xi32>
    %c-1_i32 = arith.constant -1 : i32
    %5 = vector.broadcast %c-1_i32 : i32 to vector<1x256xi32>
    %6 = arith.cmpi ne, %4, %5 : vector<1x256xi32>
    %c0_3 = arith.constant 0 : index
    %c0_4 = arith.constant 0 : index
    %7 = vector.load %arg8[%c0_3, %c0_4] : memref<1x256xf32, #tpu.memory_space<vmem>>, vector<1x256xf32>
    %8 = arith.extui %6 : vector<1x256xi1> to vector<1x256xi32>
    %9 = arith.sitofp %8 : vector<1x256xi32> to vector<1x256xf32>
    %10 = arith.addf %7, %9 : vector<1x256xf32>
    %c0_5 = arith.constant 0 : index
    %c0_6 = arith.constant 0 : index
    %11 = vector.load %arg8[%c0_5, %c0_6] : memref<1x256xf32, #tpu.memory_space<vmem>>, vector<1x256xf32>
    tpu.vector_store %arg8[%c0_5, %c0_6], %10 {strides = array<i32>} : memref<1x256xf32, #tpu.memory_space<vmem>>, vector<1x256xf32>,
    %c0_7 = arith.constant 0 : index
    %c0_8 = arith.constant 0 : index
    %c0_9 = arith.constant 0 : index
    %12 = vector.load %arg2[%c0_7, %c0_8, %c0_9] : memref<1x4x256xf32, #tpu.memory_space<vmem>>, vector<1x4x256xf32>
    %13 = vector.shape_cast %12 : vector<1x4x256xf32> to vector<4x256xf32>
    %cst = arith.constant dense<0xFF800000> : vector<256xf32>
    %14 = vector.multi_reduction <maximumf>, %13, %cst [0] : vector<4x256xf32> to vector<256xf32>
    %15 = vector.shape_cast %14 : vector<256xf32> to vector<1x256xf32>
    %16 = vector.broadcast %15 : vector<1x256xf32> to vector<4x256xf32>
    %17 = arith.subf %13, %16 : vector<4x256xf32>
    %18 = math.exp %17 : vector<4x256xf32>
    %cst_10 = arith.constant dense<0.000000e+00> : vector<256xf32>
    %19 = vector.multi_reduction <add>, %18, %cst_10 [0] : vector<4x256xf32> to vector<256xf32>
    %20 = vector.shape_cast %19 : vector<256xf32> to vector<1x256xf32>
    %21 = math.log %20 : vector<1x256xf32>
    %22 = tpu.iota {dimensions = array<i32: 0>} : vector<4x256xi32>
    %23 = vector.broadcast %4 : vector<1x256xi32> to vector<4x256xi32>
    %24 = arith.cmpi eq, %22, %23 : vector<4x256xi32>
    %cst_11 = arith.constant 0.000000e+00 : f32
    %25 = vector.broadcast %cst_11 : f32 to vector<4x256xf32>
    %26 = arith.select %24, %17, %25 : vector<4x256xi1>, vector<4x256xf32>
    %cst_12 = arith.constant dense<0.000000e+00> : vector<256xf32>
    %27 = vector.multi_reduction <add>, %26, %cst_12 [0] : vector<4x256xf32> to vector<256xf32>
    %28 = vector.shape_cast %27 : vector<256xf32> to vector<1x256xf32>
    %29 = arith.subf %21, %28 : vector<1x256xf32>
    %c0_13 = arith.constant 0 : index
    %c0_14 = arith.constant 0 : index
    %30 = vector.load %arg6[%c0_13, %c0_14] : memref<1x256xf32, #tpu.memory_space<vmem>>, vector<1x256xf32>
    %cst_15 = arith.constant 0.000000e+00 : f32
    %31 = vector.broadcast %cst_15 : f32 to vector<1x256xf32>
    %32 = arith.select %6, %29, %31 : vector<1x256xi1>, vector<1x256xf32>
    %33 = arith.addf %30, %32 : vector<1x256xf32>
    %c0_16 = arith.constant 0 : index
    %c0_17 = arith.constant 0 : index
    %34 = vector.load %arg6[%c0_16, %c0_17] : memref<1x256xf32, #tpu.memory_space<vmem>>, vector<1x256xf32>
    tpu.vector_store %arg6[%c0_16, %c0_17], %33 {strides = array<i32>} : memref<1x256xf32, #tpu.memory_space<vmem>>, vector<1x256xf32>,
    %c0_18 = arith.constant 0 : index
    %c0_19 = arith.constant 0 : index
    %c0_20 = arith.constant 0 : index
    %35 = vector.load %arg3[%c0_18, %c0_19, %c0_20] : memref<1x4x256xf32, #tpu.memory_space<vmem>>, vector<1x4x256xf32>
    %36 = vector.shape_cast %35 : vector<1x4x256xf32> to vector<4x256xf32>
    %cst_21 = arith.constant dense<0xFF800000> : vector<256xf32>
    %37 = vector.multi_reduction <maximumf>, %36, %cst_21 [0] : vector<4x256xf32> to vector<256xf32>
    %38 = vector.shape_cast %37 : vector<256xf32> to vector<1x256xf32>
    %39 = vector.broadcast %38 : vector<1x256xf32> to vector<4x256xf32>
    %40 = arith.subf %36, %39 : vector<4x256xf32>
    %41 = math.exp %40 : vector<4x256xf32>
    %cst_22 = arith.constant dense<0.000000e+00> : vector<256xf32>
    %42 = vector.multi_reduction <add>, %41, %cst_22 [0] : vector<4x256xf32> to vector<256xf32>
    %43 = vector.shape_cast %42 : vector<256xf32> to vector<1x256xf32>
    %44 = math.log %43 : vector<1x256xf32>
    %45 = tpu.iota {dimensions = array<i32: 0>} : vector<4x256xi32>
    %46 = vector.broadcast %4 : vector<1x256xi32> to vector<4x256xi32>
    %47 = arith.cmpi eq, %45, %46 : vector<4x256xi32>
    %cst_23 = arith.constant 0.000000e+00 : f32
    %48 = vector.broadcast %cst_23 : f32 to vector<4x256xf32>
    %49 = arith.select %47, %40, %48 : vector<4x256xi1>, vector<4x256xf32>
    %cst_24 = arith.constant dense<0.000000e+00> : vector<256xf32>
    %50 = vector.multi_reduction <add>, %49, %cst_24 [0] : vector<4x256xf32> to vector<256xf32>
    %51 = vector.shape_cast %50 : vector<256xf32> to vector<1x256xf32>
    %52 = arith.subf %44, %51 : vector<1x256xf32>
    %c0_25 = arith.constant 0 : index
    %c0_26 = arith.constant 0 : index
    %53 = vector.load %arg7[%c0_25, %c0_26] : memref<1x256xf32, #tpu.memory_space<vmem>>, vector<1x256xf32>
    %cst_27 = arith.constant 0.000000e+00 : f32
    %54 = vector.broadcast %cst_27 : f32 to vector<1x256xf32>
    %55 = arith.select %6, %52, %54 : vector<1x256xi1>, vector<1x256xf32>
    %56 = arith.addf %53, %55 : vector<1x256xf32>
    %c0_28 = arith.constant 0 : index
    %c0_29 = arith.constant 0 : index
    %57 = vector.load %arg7[%c0_28, %c0_29] : memref<1x256xf32, #tpu.memory_space<vmem>>, vector<1x256xf32>
    tpu.vector_store %arg7[%c0_28, %c0_29], %56 {strides = array<i32>} : memref<1x256xf32, #tpu.memory_space<vmem>>, vector<1x256xf32>,
    %c0_i32_30 = arith.constant 0 : i32
    %58 = arith.cmpi eq, %arg1, %c0_i32_30 : i32
    %59 = arith.extui %58 : i1 to i32
    %c0_i32_31 = arith.constant 0 : i32
    %60 = arith.cmpi ne, %59, %c0_i32_31 : i32
    scf.if %60 {
      %61 = tpu.iota {dimensions = array<i32: 0>} : vector<3x128xi32>
      %cst_32 = arith.constant 0.000000e+00 : f32
      %62 = vector.broadcast %cst_32 : f32 to vector<3x128xf32>
      %c0_33 = arith.constant 0 : index
      %c0_34 = arith.constant 0 : index
      %63 = vector.load %arg6[%c0_33, %c0_34] : memref<1x256xf32, #tpu.memory_space<vmem>>, vector<1x256xf32>
      %64 = vector.shape_cast %63 : vector<1x256xf32> to vector<1x1x256xf32>
      %cst_35 = arith.constant dense<0.000000e+00> : vector<1xf32>
      %65 = vector.multi_reduction <add>, %64, %cst_35 [1, 2] : vector<1x1x256xf32> to vector<1xf32>
      %66 = vector.shape_cast %65 : vector<1xf32> to vector<1x1x1xf32>
      %67 = vector.extract %66[0, 0, 0] : f32 from vector<1x1x1xf32>
      %c0_i32_36 = arith.constant 0 : i32
      %68 = vector.broadcast %c0_i32_36 : i32 to vector<3x128xi32>
      %69 = arith.cmpi eq, %61, %68 : vector<3x128xi32>
      %70 = vector.broadcast %67 : f32 to vector<3x128xf32>
      %71 = arith.select %69, %70, %62 : vector<3x128xi1>, vector<3x128xf32>
      %c0_37 = arith.constant 0 : index
      %c0_38 = arith.constant 0 : index
      %72 = vector.load %arg7[%c0_37, %c0_38] : memref<1x256xf32, #tpu.memory_space<vmem>>, vector<1x256xf32>
      %73 = vector.shape_cast %72 : vector<1x256xf32> to vector<1x1x256xf32>
      %cst_39 = arith.constant dense<0.000000e+00> : vector<1xf32>
      %74 = vector.multi_reduction <add>, %73, %cst_39 [1, 2] : vector<1x1x256xf32> to vector<1xf32>
      %75 = vector.shape_cast %74 : vector<1xf32> to vector<1x1x1xf32>
      %76 = vector.extract %75[0, 0, 0] : f32 from vector<1x1x1xf32>
      %c1_i32 = arith.constant 1 : i32
      %77 = vector.broadcast %c1_i32 : i32 to vector<3x128xi32>
      %78 = arith.cmpi eq, %61, %77 : vector<3x128xi32>
      %79 = vector.broadcast %76 : f32 to vector<3x128xf32>
      %80 = arith.select %78, %79, %71 : vector<3x128xi1>, vector<3x128xf32>
      %c0_40 = arith.constant 0 : index
      %c0_41 = arith.constant 0 : index
      %81 = vector.load %arg8[%c0_40, %c0_41] : memref<1x256xf32, #tpu.memory_space<vmem>>, vector<1x256xf32>
      %82 = vector.shape_cast %81 : vector<1x256xf32> to vector<1x1x256xf32>
      %cst_42 = arith.constant dense<0.000000e+00> : vector<1xf32>
      %83 = vector.multi_reduction <add>, %82, %cst_42 [1, 2] : vector<1x1x256xf32> to vector<1xf32>
      %84 = vector.shape_cast %83 : vector<1xf32> to vector<1x1x1xf32>
      %85 = vector.extract %84[0, 0, 0] : f32 from vector<1x1x1xf32>
      %c2_i32 = arith.constant 2 : i32
      %86 = vector.broadcast %c2_i32 : i32 to vector<3x128xi32>
      %87 = arith.cmpi eq, %61, %86 : vector<3x128xi32>
      %88 = vector.broadcast %85 : f32 to vector<3x128xf32>
      %89 = arith.select %87, %88, %80 : vector<3x128xi1>, vector<3x128xf32>
      %90 = vector.shape_cast %89 : vector<3x128xf32> to vector<1x3x128xf32>
      %c0_43 = arith.constant 0 : index
      %c0_44 = arith.constant 0 : index
      %c0_45 = arith.constant 0 : index
      %91 = vector.load %arg5[%c0_43, %c0_44, %c0_45] : memref<1x3x128xf32, #tpu.memory_space<vmem>>, vector<1x3x128xf32>
      tpu.vector_store %arg5[%c0_43, %c0_44, %c0_45], %90 {strides = array<i32>} : memref<1x3x128xf32, #tpu.memory_space<vmem>>, vector<1x3x128xf32>,
    } else {
    }
    return
  }
  func.func @transform_0(%arg0: i32, %arg1: i32) -> (i32, i32, i32) {
    %c0_i32 = arith.constant 0 : i32
    %c0_i32_0 = arith.constant 0 : i32
    return %arg0, %c0_i32, %arg1 : i32, i32, i32
  }
  func.func @transform_1(%arg0: i32, %arg1: i32) -> (i32, i32, i32) {
    %c0_i32 = arith.constant 0 : i32
    %c0_i32_0 = arith.constant 0 : i32
    return %arg0, %c0_i32, %arg1 : i32, i32, i32
  }
  func.func @transform_2(%arg0: i32, %arg1: i32) -> (i32, i32, i32) {
    %c0_i32 = arith.constant 0 : i32
    %c0_i32_0 = arith.constant 0 : i32
    return %arg0, %c0_i32, %arg1 : i32, i32, i32
  }
  func.func @transform_3(%arg0: i32, %arg1: i32) -> (i32, i32, i32) {
    %c0_i32 = arith.constant 0 : i32
    %c0_i32_0 = arith.constant 0 : i32
    %c0_i32_1 = arith.constant 0 : i32
    return %arg0, %c0_i32, %c0_i32_0 : i32, i32, i32
  }
}

</mosaic_0001>

<llo_original>
// kernel: tpu_custom_call.1
$region0: #{tpu_custom_call.1}
  #allocation0 [shape = 'u32[]', space=smem, size = 0x4, offset = 0x4, fixed_abs, tag = 'smem constant byte address 0x4 - core index']
  #allocation1 [shape = 'u32[144,128]{1,0:T(1,128)}', space=vmem, size = 0x12000, scoped, tag = 'internal scratch']
  #allocation2 [shape = 'f32[1,256]{1,0:T(1,128)}', space=vmem, size = 0x400, scoped, tag = 'scratch operand']
  #allocation3 [shape = 'f32[1,256]{1,0:T(1,128)}', space=vmem, size = 0x400, scoped, tag = 'scratch operand']
  #allocation4 [shape = 'f32[1,256]{1,0:T(1,128)}', space=vmem, size = 0x400, scoped, tag = 'scratch operand']
  %s0 = inlined_call_operand.hbm [shape: f32[2,4,256], index: 0, kind: input, shape index: {}]
  %s1 = inlined_call_operand.hbm [shape: f32[2,4,256], index: 1, kind: input, shape index: {}]
  %s2 = inlined_call_operand.vmem [shape: s32[2,1,256], index: 2, kind: input, shape index: {}]
  %s3 = inlined_call_operand.vmem [shape: f32[2,3,128], index: 3, kind: output, shape index: {}]
  %s4 = sld [smem:[#allocation0]]
  $region61: #{tpu_custom_call.1} parent=0
    _
  %s6 = ssub.s32 1, %s4
  %s7 = scalar_select 0, %s6, %s4
  $region1: #{tpu_custom_call.1} parent=0
    #allocation5 [shape = 'u8[8192]{0}', space=vmem, size = 0x2000, scoped, tag = 'input window, operand 0']
    #allocation6 [shape = 's32[2]{0}', space=sflag, size = 0x8, scoped, tag = 'scoped memory for tpu_custom_call.1']
    #allocation7 [shape = 'u8[8192]{0}', space=vmem, size = 0x2000, scoped, tag = 'input window, operand 1']
    #allocation8 [shape = 's32[2]{0}', space=sflag, size = 0x8, scoped, tag = 'scoped memory for tpu_custom_call.1']
    %8 = vsyncpa [#allocation6], 0
    %s9 = scalar_lea.sflag [#allocation6], 1
    %10 = vsyncpa %s9, 0
    %11 = vsyncpa [#allocation8], 0
    %s12 = scalar_lea.sflag [#allocation8], 1
    %13 = vsyncpa %s12, 0
    loop: start=0, step=1, limit=4
    $region2: #{tpu_custom_call.1} parent=1 // loop_pre_header
      _
    $region3: #{tpu_custom_call.1} parent=1 // loop_header
      %s15 = sphi 0, %s19
      %p16 = scmp.ge.s32.totalorder %s15, 4
      %s22 = sphi 0, %s34
      %s23 = sphi 0, %s30
      %s24 = sphi 0, %s22
      %s25 = sphi 0, %s23
      %s26 = sphi 0, %s24
      %s27 = sphi 0, %s25
      %s39 = sphi 0, %s41
      %s42 = sphi 0, %s39
      %s43 = sphi 0, %s42
      %s59 = sphi 0, %s43
      %s67 = sphi 0, %s69
      %s70 = sphi 0, %s67
      %s71 = sphi 0, %s70
      %s87 = sphi 0, %s71
      %s95 = sphi 0, %s97
      %s98 = sphi 0, %s95
      %s99 = sphi 0, %s98
      %s115 = sphi 0, %s99
      %s121 = sphi 0, %s123
      %s124 = sphi 0, %s121
      %s125 = sphi 0, %s124
      %s141 = sphi 0, %s125
    $region4: #{tpu_custom_call.1} parent=1 // loop_header_branch
      %18 = sbr.rel (%p16) target = $region8
    $region5: #{tpu_custom_call.1} parent=1 // loop_body
      %s20 = ssub.s32 %s15, 1
      %s21 = ssub.s32 %s15, 2
      %s28 = sadd.s32 1, %s23
      %p29 = scmp.ge.s32.totalorder %s28, 1
      %s30 = scalar_select %p29, 0, %s28
      %s31 = sadd.s32 1, %s22
      %s32 = scalar_select %p29, %s31, %s22
      %p33 = scmp.ge.s32.totalorder %s32, 2
      %s34 = scalar_select %p33, 0, %s32
      %s35 = ssub.s32 %s22, %s34
      %s36 = ssub.s32 %s23, %s30
      %s37 = sor.u32 %s35, %s36
      %p38 = scmp.eq.s32.totalorder %s37, 0
      %s40 = sadd.s32 %s39, 1
      %s41 = scalar_select %p38, %s39, %s40
      %p44 = pneg %p38
      %p45 = scmp.eq.s32.totalorder %s15, 1
      %p46 = por %p44, %p45
      %p47 = scmp.ne.s32.totalorder %s39, %s42
      %p48 = scmp.eq.s32.totalorder %s15, 0
      %p49 = por %p47, %p48
      %p50 = scmp.ne.s32.totalorder %s39, %s42
      %p51 = scmp.eq.s32.totalorder %s20, 1
      %p52 = por %p50, %p51
      %p53 = scmp.ne.s32.totalorder %s42, %s43
      %p54 = scmp.eq.s32.totalorder %s20, 0
      %p55 = por %p53, %p54
      %p56 = scmp.ne.s32.totalorder %s42, %s43
      %p57 = scmp.eq.s32.totalorder %s21, 1
      %p58 = por %p56, %p57
      %p60 = scmp.ne.s32.totalorder %s43, %s59
      %p61 = scmp.eq.s32.totalorder %s21, 0
      %p62 = por %p60, %p61
      %s63 = ssub.s32 %s22, %s34
      %s64 = ssub.s32 %s23, %s30
      %s65 = sor.u32 %s63, %s64
      %p66 = scmp.eq.s32.totalorder %s65, 0
      %s68 = sadd.s32 %s67, 1
      %s69 = scalar_select %p66, %s67, %s68
      %p72 = pneg %p66
      %p73 = scmp.eq.s32.totalorder %s15, 1
      %p74 = por %p72, %p73
      %p75 = scmp.ne.s32.totalorder %s67, %s70
      %p76 = scmp.eq.s32.totalorder %s15, 0
      %p77 = por %p75, %p76
      %p78 = scmp.ne.s32.totalorder %s67, %s70
      %p79 = scmp.eq.s32.totalorder %s20, 1
      %p80 = por %p78, %p79
      %p81 = scmp.ne.s32.totalorder %s70, %s71
      %p82 = scmp.eq.s32.totalorder %s20, 0
      %p83 = por %p81, %p82
      %p84 = scmp.ne.s32.totalorder %s70, %s71
      %p85 = scmp.eq.s32.totalorder %s21, 1
      %p86 = por %p84, %p85
      %p88 = scmp.ne.s32.totalorder %s71, %s87
      %p89 = scmp.eq.s32.totalorder %s21, 0
      %p90 = por %p88, %p89
      %s91 = ssub.s32 %s22, %s34
      %s92 = ssub.s32 %s23, %s30
      %s93 = sor.u32 %s91, %s92
      %p94 = scmp.eq.s32.totalorder %s93, 0
      %s96 = sadd.s32 %s95, 1
      %s97 = scalar_select %p94, %s95, %s96
      %p100 = pneg %p94
      %p101 = scmp.eq.s32.totalorder %s15, 1
      %p102 = por %p100, %p101
      %p103 = scmp.ne.s32.totalorder %s95, %s98
      %p104 = scmp.eq.s32.totalorder %s15, 0
      %p105 = por %p103, %p104
      %p106 = scmp.ne.s32.totalorder %s95, %s98
      %p107 = scmp.eq.s32.totalorder %s20, 1
      %p108 = por %p106, %p107
      %p109 = scmp.ne.s32.totalorder %s98, %s99
      %p110 = scmp.eq.s32.totalorder %s20, 0
      %p111 = por %p109, %p110
      %p112 = scmp.ne.s32.totalorder %s98, %s99
      %p113 = scmp.eq.s32.totalorder %s21, 1
      %p114 = por %p112, %p113
      %p116 = scmp.ne.s32.totalorder %s99, %s115
      %p117 = scmp.eq.s32.totalorder %s21, 0
      %p118 = por %p116, %p117
      %s119 = ssub.s32 %s22, %s34
      %p120 = scmp.eq.s32.totalorder %s119, 0
      %s122 = sadd.s32 %s121, 1
      %s123 = scalar_select %p120, %s121, %s122
      %p126 = pneg %p120
      %p127 = scmp.eq.s32.totalorder %s15, 1
      %p128 = por %p126, %p127
      %p129 = scmp.ne.s32.totalorder %s121, %s124
      %p130 = scmp.eq.s32.totalorder %s15, 0
      %p131 = por %p129, %p130
      %p132 = scmp.ne.s32.totalorder %s121, %s124
      %p133 = scmp.eq.s32.totalorder %s20, 1
      %p134 = por %p132, %p133
      %p135 = scmp.ne.s32.totalorder %s124, %s125
      %p136 = scmp.eq.s32.totalorder %s20, 0
      %p137 = por %p135, %p136
      %p138 = scmp.ne.s32.totalorder %s124, %s125
      %p139 = scmp.eq.s32.totalorder %s21, 1
      %p140 = por %p138, %p139
      %p142 = scmp.ne.s32.totalorder %s125, %s141
      %p143 = scmp.eq.s32.totalorder %s21, 0
      %p144 = por %p142, %p143
      %p145 = scmp.le.s32.totalorder 1, %s15
      %p146 = scmp.lt.s32.totalorder %s15, 3
      %p147 = pnand %p145, %p146
      %p148 = pneg %p147
      // Predicated region
      $region9: #{tpu_custom_call.1} parent=5 // pred_check
        _
      $region10: #{tpu_custom_call.1} parent=5 // pred_check_branch
        %150 = sbr.rel (%p147) target = $region12
      $region11: #{tpu_custom_call.1} parent=5 // pred_region
        %s151 = ssub.s32 %s15, 1
      $region12: #{tpu_custom_call.1} parent=5 // pred_fallthru
        _
      %p152 = scmp.lt.s32.totalorder %s15, 2
      // Predicated region
      $region13: #{tpu_custom_call.1} parent=5 // pred_check
        %p153 = pneg %p152
      $region14: #{tpu_custom_call.1} parent=5 // pred_check_branch
        %155 = sbr.rel (%p153) target = $region16
      $region15: #{tpu_custom_call.1} parent=5 // pred_region
        // Predicated region
        $region17: #{tpu_custom_call.1} parent=15 // pred_check
          %p156 = pneg %p49
        $region18: #{tpu_custom_call.1} parent=15 // pred_check_branch
          %158 = sbr.rel (%p156) target = $region20
        $region19: #{tpu_custom_call.1} parent=15 // pred_region
          %s159 = sand.u32 %s39, 1
          %s160 = scalar_lea.sflag [#allocation6], %s159
          %s161 = sand.u32 %s39, 1
          %s162 = smul.addr %s161, 8
          %s163 = scalar_lea.vmem [#allocation5], %s162
          %s164 = smul.u32 2, %s23
          %s166 = ssub.s32 128, 128
          %167 = vsyncadd %s160, %s166
          %s168 = smul.addr %s22, 2
          %s169 = sadd.s32 %s164, %s168
          %s170 = smul.addr %s169, 64
          %s171 = scalar_lea.hbm %s0, %s170
          %s173 = sshll.u32 %s163, 4
          %s174 = int_to_ptr.vmem [resolvable:$true] %s173
          %176 = dma.hbm_to_vmem [thread:$0]  %s171, 128, %s174, %s160
        $region20: #{tpu_custom_call.1} parent=15 // pred_fallthru
          _
        // Predicated region
        $region21: #{tpu_custom_call.1} parent=15 // pred_check
          %p177 = pneg %p77
        $region22: #{tpu_custom_call.1} parent=15 // pred_check_branch
          %179 = sbr.rel (%p177) target = $region24
        $region23: #{tpu_custom_call.1} parent=15 // pred_region
          %s180 = sand.u32 %s67, 1
          %s181 = scalar_lea.sflag [#allocation8], %s180
          %s182 = sand.u32 %s67, 1
          %s183 = smul.addr %s182, 8
          %s184 = scalar_lea.vmem [#allocation7], %s183
          %s185 = smul.u32 2, %s23
          %s187 = ssub.s32 128, 128
          %188 = vsyncadd %s181, %s187
          %s189 = smul.addr %s22, 2
          %s190 = sadd.s32 %s185, %s189
          %s191 = smul.addr %s190, 64
          %s192 = scalar_lea.hbm %s1, %s191
          %s194 = sshll.u32 %s184, 4
          %s195 = int_to_ptr.vmem [resolvable:$true] %s194
          %197 = dma.hbm_to_vmem [thread:$0]  %s192, 128, %s195, %s181
        $region24: #{tpu_custom_call.1} parent=15 // pred_fallthru
          _
        // Predicated region
        $region25: #{tpu_custom_call.1} parent=15 // pred_check
          %p198 = pneg %p105
        $region26: #{tpu_custom_call.1} parent=15 // pred_check_branch
          %200 = sbr.rel (%p198) target = $region28
        $region27: #{tpu_custom_call.1} parent=15 // pred_region
          %s201 = smul.u32 2, %s23
          %p202 = scmp.lt.s32.totalorder %s22, 1
          %s203 = scalar_select %p202, %s22, 1
          %p204 = scmp.lt.s32.totalorder %s201, 1
          %s205 = scalar_select %p204, %s201, 1
          %s206 = smul.addr %s203, 2
          %s207 = sadd.s32 %s205, %s206
          %s208 = scalar_lea.vmem %s2, %s207
          %s209 = smul.u32 2, %s23
        $region28: #{tpu_custom_call.1} parent=15 // pred_fallthru
          _
      $region16: #{tpu_custom_call.1} parent=5 // pred_fallthru
        _
      %p210 = scmp.le.s32.totalorder 1, %s15
      %p211 = scmp.lt.s32.totalorder %s15, 3
      %p212 = pnand %p210, %p211
      %p213 = pneg %p212
      // Predicated region
      $region29: #{tpu_custom_call.1} parent=5 // pred_check
        _
      $region30: #{tpu_custom_call.1} parent=5 // pred_check_branch
        %215 = sbr.rel (%p212) target = $region32
      $region31: #{tpu_custom_call.1} parent=5 // pred_region
        %s216 = ssub.s32 %s15, 1
        %s217 = sand.u32 %s42, 1
        %s218 = scalar_lea.sflag [#allocation6], %s217
        %s219 = sand.u32 %s42, 1
        %s220 = smul.addr %s219, 8
        %s221 = scalar_lea.vmem [#allocation5], %s220
        // Predicated region
        $region33: #{tpu_custom_call.1} parent=31 // pred_check
          %p222 = pneg %p55
        $region34: #{tpu_custom_call.1} parent=31 // pred_check_branch
          %224 = sbr.rel (%p222) target = $region36
        $region35: #{tpu_custom_call.1} parent=31 // pred_region
          %225 = dma.done %s218, 128
        $region36: #{tpu_custom_call.1} parent=31 // pred_fallthru
          _
        %s226 = sand.u32 %s70, 1
        %s227 = scalar_lea.sflag [#allocation8], %s226
        %s228 = sand.u32 %s70, 1
        %s229 = smul.addr %s228, 8
        %s230 = scalar_lea.vmem [#allocation7], %s229
        // Predicated region
        $region37: #{tpu_custom_call.1} parent=31 // pred_check
          %p231 = pneg %p83
        $region38: #{tpu_custom_call.1} parent=31 // pred_check_branch
          %233 = sbr.rel (%p231) target = $region40
        $region39: #{tpu_custom_call.1} parent=31 // pred_region
          %234 = dma.done %s227, 128
        $region40: #{tpu_custom_call.1} parent=31 // pred_fallthru
          _
        %s235 = sand.u32 %s42, 1
        %s236 = scalar_lea.sflag [#allocation6], %s235
        %s237 = sand.u32 %s42, 1
        %s238 = smul.addr %s237, 8
        %s239 = scalar_lea.vmem [#allocation5], %s238
        %p240 = pneg %p55
        %p241 = pneg %p52
        %s242 = sand.u32 %s70, 1
        %s243 = scalar_lea.sflag [#allocation8], %s242
        %s244 = sand.u32 %s70, 1
        %s245 = smul.addr %s244, 8
        %s246 = scalar_lea.vmem [#allocation7], %s245
        %p247 = pneg %p83
        %p248 = pneg %p80
        %s249 = smul.u32 2, %s25
        %p250 = scmp.lt.s32.totalorder %s24, 1
        %s251 = scalar_select %p250, %s24, 1
        %p252 = scmp.lt.s32.totalorder %s249, 1
        %s253 = scalar_select %p252, %s249, 1
        %s254 = smul.addr %s251, 2
        %s255 = sadd.s32 %s253, %s254
        %s256 = scalar_lea.vmem %s2, %s255
        %p257 = pneg %p111
        %p258 = pneg %p108
        %p259 = pneg %p137
        %p260 = pneg %p134
        %p261 = scmp.lt.s32.totalorder %s24, 1
        %s262 = scalar_select %p261, %s24, 1
        %s263 = smul.addr %s262, 4
        %s264 = scalar_lea.vmem %s3, %s263
        %s265 = smul.u32 2, %s25
        %s266 = smul.u32 2, %s25
        %s267 = smul.u32 2, %s25
        %p268 = scmp.lt.s32.totalorder %s24, 1
        %s269 = scalar_select %p268, %s24, 1
        %p270 = scmp.lt.s32.totalorder %s267, 1
        %s271 = scalar_select %p270, %s267, 1
        %s272 = smul.addr %s269, 2
        %s273 = sadd.s32 %s271, %s272
        %s274 = scalar_lea.vmem %s2, %s273
        %s275 = smul.u32 2, %s25
        %p276 = scmp.lt.s32.totalorder %s24, 1
        %s277 = scalar_select %p276, %s24, 1
        %s278 = smul.addr %s277, 4
        %s279 = scalar_lea.vmem %s3, %s278
        %p280 = scmp.eq.s32.totalorder %s25, 0
        // Predicated region
        $region41: #{tpu_custom_call.1} parent=31 // pred_check
          %p281 = pneg %p280
        $region42: #{tpu_custom_call.1} parent=31 // pred_check_branch
          %283 = sbr.rel (%p281) target = $region44
        $region43: #{tpu_custom_call.1} parent=31 // pred_region
          %v284 = vlaneseq
          %vm285 = vcmp.ge.s32.totalorder %v284, 0
          %vm286 = vcmp.lt.s32.totalorder %v284, 256
          %vm287 = vmand %vm285, %vm286
          %288 = vst.msk [vmem:[#allocation2] sm:$0x3] %vm287, 0.0
          %289 = vst.msk [vmem:[#allocation3] sm:$0x3] %vm287, 0.0
          %290 = vst.msk [vmem:[#allocation4] sm:$0x3] %vm287, 0.0
        $region44: #{tpu_custom_call.1} parent=31 // pred_fallthru
          _
        %v291 = vld [vmem:[%s274] sm:$0x3]
        %vm292 = vcmp.ne.s32.totalorder %v291, 4294967295
        %v293 = vld [vmem:[#allocation4] sm:$0x3]
        %v294 = vsel %vm292, 1, 0
        %v295 = vcvt.s32.f32 %v294
        %v296 = vadd.f32 %v293, %v295
        %v297 = vlaneseq
        %vm298 = vcmp.ge.s32.totalorder %v297, 0
        %vm299 = vcmp.lt.s32.totalorder %v297, 256
        %vm300 = vmand %vm298, %vm299
        %301 = vst.msk [vmem:[#allocation4] sm:$0x3] %vm300, %v296
        %v302 = vld [vmem:[%s221] sm:$0xff]
        %v304 = vcombine.high %v302, %v302
        %vm306 = vcmask 1043456
        %v307 = vsel %vm306, %v302, -inf
        %v308 = vrot.slane %v307, 4
        %v309 = vmax.f32 %v307, %v308
        %v310 = vrot.slane %v309, 2
        %v311 = vmax.f32 %v309, %v310
        %v312 = vrot.slane %v311, 1
        %v313 = vmax.f32 %v311, %v312
        %v314 = vsel %vm306, %v304, -inf
        %v315 = vrot.slane %v314, 4
        %v316 = vmax.f32 %v314, %v315
        %v317 = vrot.slane %v316, 2
        %v318 = vmax.f32 %v316, %v317
        %v319 = vrot.slane %v318, 1
        %v320 = vmax.f32 %v318, %v319
        %v323 = vcombine.low %v313, %v320
        %v325 = vsub.f32 %v302, %v323
        %v326 = vmul.f32 %v325, 1.442695
        %v327 = vpow.pop %v326
        %v329 = vcombine.high %v327, %v327
        %v331 = vsel %vm306, %v327, 0.0
        %v332 = vrot.slane %v331, 4
        %v333 = vadd.f32 %v331, %v332
        %v334 = vrot.slane %v333, 2
        %v335 = vadd.f32 %v333, %v334
        %v336 = vrot.slane %v335, 1
        %v337 = vadd.f32 %v335, %v336
        %v338 = vsel %vm306, %v329, 0.0
        %v339 = vrot.slane %v338, 4
        %v340 = vadd.f32 %v338, %v339
        %v341 = vrot.slane %v340, 2
        %v342 = vadd.f32 %v340, %v341
        %v343 = vrot.slane %v342, 1
        %v344 = vadd.f32 %v342, %v343
        %v345 = vlog2.pop %v337
        %v346 = vmul.f32 %v345, 0.6931472
        %v347 = vlog2.pop %v344
        %v348 = vmul.f32 %v347, 0.6931472
        %v349 = vlaneseq
        %v350 = vshrl.u32 %v349, 7
        %v351 = vlaneseq
        %v352 = vshrl.u32 %v351, 7
        %v353 = vsub.s32 0, %v352
        %v354 = vrot.slane %v291, %v353
        %v355 = vlaneseq
        %v356 = vshrl.u32 %v355, 7
        %v357 = vsub.s32 1, %v356
        %v358 = vrot.slane %v291, %v357
        %vm359 = vcmp.eq.s32.totalorder %v350, %v354
        %vm360 = vcmp.eq.s32.totalorder %v350, %v358
        %v362 = vcombine.high %v325, %v325
        %v364 = vsel %vm359, %v325, 0.0
        %v365 = vsel %vm360, %v362, 0.0
        %v366 = vsel %vm306, %v364, 0.0
        %v367 = vrot.slane %v366, 4
        %v368 = vadd.f32 %v366, %v367
        %v369 = vrot.slane %v368, 2
        %v370 = vadd.f32 %v368, %v369
        %v371 = vrot.slane %v370, 1
        %v372 = vadd.f32 %v370, %v371
        %v373 = vsel %vm306, %v365, 0.0
        %v374 = vrot.slane %v373, 4
        %v375 = vadd.f32 %v373, %v374
        %v376 = vrot.slane %v375, 2
        %v377 = vadd.f32 %v375, %v376
        %v378 = vrot.slane %v377, 1
        %v379 = vadd.f32 %v377, %v378
        %v380 = vsub.f32 %v346, %v372
        %v381 = vsub.f32 %v348, %v379
        %v382 = vld [vmem:[#allocation2] sm:$0x3]
        %v385 = vcombine.low %v380, %v381
        %v387 = vunpack.c.l.s4 1966171168
        %v388 = vunpack.c.0.s8 %v387
        %v389 = vlaneseq
        %v390 = vshrl.u32 %v389, 7
        %v391 = vsub.s32 %v388, %v390
        %v392 = vrot.slane %v385, %v391
        %v394 = vunpack.c.l.s4 1966171168
        %v395 = vunpack.c.0.s8 %v394
        %v396 = vlaneseq
        %v397 = vshrl.u32 %v396, 7
        %v398 = vsub.s32 %v395, %v397
        %v399 = vrot.slane %v392, %v398
        %v401 = vsel %vm292, %v399, 0.0
        %v402 = vadd.f32 %v382, %v401
        %403 = vst.msk [vmem:[#allocation2] sm:$0x3] %vm300, %v402
        %v404 = vld [vmem:[%s230] sm:$0xff]
        %v406 = vcombine.high %v404, %v404
        %v408 = vsel %vm306, %v404, -inf
        %v409 = vrot.slane %v408, 4
        %v410 = vmax.f32 %v408, %v409
        %v411 = vrot.slane %v410, 2
        %v412 = vmax.f32 %v410, %v411
        %v413 = vrot.slane %v412, 1
        %v414 = vmax.f32 %v412, %v413
        %v415 = vsel %vm306, %v406, -inf
        %v416 = vrot.slane %v415, 4
        %v417 = vmax.f32 %v415, %v416
        %v418 = vrot.slane %v417, 2
        %v419 = vmax.f32 %v417, %v418
        %v420 = vrot.slane %v419, 1
        %v421 = vmax.f32 %v419, %v420
        %v424 = vcombine.low %v414, %v421
        %v426 = vsub.f32 %v404, %v424
        %v427 = vmul.f32 %v426, 1.442695
        %v428 = vpow.pop %v427
        %v430 = vcombine.high %v428, %v428
        %v432 = vsel %vm306, %v428, 0.0
        %v433 = vrot.slane %v432, 4
        %v434 = vadd.f32 %v432, %v433
        %v435 = vrot.slane %v434, 2
        %v436 = vadd.f32 %v434, %v435
        %v437 = vrot.slane %v436, 1
        %v438 = vadd.f32 %v436, %v437
        %v439 = vsel %vm306, %v430, 0.0
        %v440 = vrot.slane %v439, 4
        %v441 = vadd.f32 %v439, %v440
        %v442 = vrot.slane %v441, 2
        %v443 = vadd.f32 %v441, %v442
        %v444 = vrot.slane %v443, 1
        %v445 = vadd.f32 %v443, %v444
        %v446 = vlog2.pop %v438
        %v447 = vmul.f32 %v446, 0.6931472
        %v448 = vlog2.pop %v445
        %v449 = vmul.f32 %v448, 0.6931472
        %v451 = vcombine.high %v426, %v426
        %v453 = vsel %vm359, %v426, 0.0
        %v454 = vsel %vm360, %v451, 0.0
        %v455 = vsel %vm306, %v453, 0.0
        %v456 = vrot.slane %v455, 4
        %v457 = vadd.f32 %v455, %v456
        %v458 = vrot.slane %v457, 2
        %v459 = vadd.f32 %v457, %v458
        %v460 = vrot.slane %v459, 1
        %v461 = vadd.f32 %v459, %v460
        %v462 = vsel %vm306, %v454, 0.0
        %v463 = vrot.slane %v462, 4
        %v464 = vadd.f32 %v462, %v463
        %v465 = vrot.slane %v464, 2
        %v466 = vadd.f32 %v464, %v465
        %v467 = vrot.slane %v466, 1
        %v468 = vadd.f32 %v466, %v467
        %v469 = vsub.f32 %v447, %v461
        %v470 = vsub.f32 %v449, %v468
        %v471 = vld [vmem:[#allocation3] sm:$0x3]
        %v474 = vcombine.low %v469, %v470
        %v476 = vunpack.c.l.s4 1966171168
        %v477 = vunpack.c.0.s8 %v476
        %v478 = vlaneseq
        %v479 = vshrl.u32 %v478, 7
        %v480 = vsub.s32 %v477, %v479
        %v481 = vrot.slane %v474, %v480
        %v483 = vunpack.c.l.s4 1966171168
        %v484 = vunpack.c.0.s8 %v483
        %v485 = vlaneseq
        %v486 = vshrl.u32 %v485, 7
        %v487 = vsub.s32 %v484, %v486
        %v488 = vrot.slane %v481, %v487
        %v490 = vsel %vm292, %v488, 0.0
        %v491 = vadd.f32 %v471, %v490
        %492 = vst.msk [vmem:[#allocation3] sm:$0x3] %vm300, %v491
        // Predicated region
        $region45: #{tpu_custom_call.1} parent=31 // pred_check
          %p493 = pneg %p280
        $region46: #{tpu_custom_call.1} parent=31 // pred_check_branch
          %495 = sbr.rel (%p493) target = $region48
        $region47: #{tpu_custom_call.1} parent=31 // pred_region
          %v496 = vld [vmem:[#allocation2] sm:$0x3]
          %v498 = vlaneseq
          %v499 = vshrl.u32 %v498, 7
          %v500 = vsub.s32 0, %v499
          %v501 = vrot.slane %v496, %v500
          %v502 = vlaneseq
          %v503 = vshrl.u32 %v502, 7
          %v504 = vsub.s32 1, %v503
          %v505 = vrot.slane %v496, %v504
          %vm508 = vcmask 1040384
          %v509 = vsel %vm508, %v501, 0.0
          %v510 = vsel %vm508, %v505, 0.0
          %v511 = vadd.f32 %v509, %v510
          %512 = vadd.xlane.f32.xlu0 %v511
          %v513 = vpop.xlane.xlu0 %512
          %v514 = vrot.slane %v513, 4
          %v515 = vadd.f32 %v513, %v514
          %v516 = vrot.slane %v515, 2
          %v517 = vadd.f32 %v515, %v516
          %v518 = vrot.slane %v517, 1
          %v519 = vadd.f32 %v517, %v518
          %s520 = vtos %v519
          %vm521 = vcmp.eq.s32.totalorder %v350, 0
          %v522 = vstv %s520
          %v523 = vsel %vm521, %v522, 0.0
          %v524 = vld [vmem:[#allocation3] sm:$0x3]
          %v526 = vlaneseq
          %v527 = vshrl.u32 %v526, 7
          %v528 = vsub.s32 0, %v527
          %v529 = vrot.slane %v524, %v528
          %v530 = vlaneseq
          %v531 = vshrl.u32 %v530, 7
          %v532 = vsub.s32 1, %v531
          %v533 = vrot.slane %v524, %v532
          %v536 = vsel %vm508, %v529, 0.0
          %v537 = vsel %vm508, %v533, 0.0
          %v538 = vadd.f32 %v536, %v537
          %539 = vadd.xlane.f32.xlu0 %v538
          %v540 = vpop.xlane.xlu0 %539
          %v541 = vrot.slane %v540, 4
          %v542 = vadd.f32 %v540, %v541
          %v543 = vrot.slane %v542, 2
          %v544 = vadd.f32 %v542, %v543
          %v545 = vrot.slane %v544, 1
          %v546 = vadd.f32 %v544, %v545
          %s547 = vtos %v546
          %vm548 = vcmp.eq.s32.totalorder %v350, 1
          %v549 = vstv %s547
          %v550 = vsel %vm548, %v549, %v523
          %v551 = vld [vmem:[#allocation4] sm:$0x3]
          %v553 = vlaneseq
          %v554 = vshrl.u32 %v553, 7
          %v555 = vsub.s32 0, %v554
          %v556 = vrot.slane %v551, %v555
          %v557 = vlaneseq
          %v558 = vshrl.u32 %v557, 7
          %v559 = vsub.s32 1, %v558
          %v560 = vrot.slane %v551, %v559
          %v563 = vsel %vm508, %v556, 0.0
          %v564 = vsel %vm508, %v560, 0.0
          %v565 = vadd.f32 %v563, %v564
          %566 = vadd.xlane.f32.xlu0 %v565
          %v567 = vpop.xlane.xlu0 %566
          %v568 = vrot.slane %v567, 4
          %v569 = vadd.f32 %v567, %v568
          %v570 = vrot.slane %v569, 2
          %v571 = vadd.f32 %v569, %v570
          %v572 = vrot.slane %v571, 1
          %v573 = vadd.f32 %v571, %v572
          %s574 = vtos %v573
          %vm575 = vcmp.eq.s32.totalorder %v350, 2
          %v576 = vstv %s574
          %v577 = vsel %vm575, %v576, %v550
          %578 = vst [vmem:[%s279] sm:$0x7] %v577
        $region48: #{tpu_custom_call.1} parent=31 // pred_fallthru
          _
        %p579 = scmp.lt.s32.totalorder %s24, 1
        %s580 = scalar_select %p579, %s24, 1
        %s581 = smul.addr %s580, 4
        %s582 = scalar_lea.vmem %s3, %s581
        // Predicated region
        $region49: #{tpu_custom_call.1} parent=31 // pred_check
          %p583 = pneg %p134
        $region50: #{tpu_custom_call.1} parent=31 // pred_check_branch
          %585 = sbr.rel (%p583) target = $region52
        $region51: #{tpu_custom_call.1} parent=31 // pred_region
          _
        $region52: #{tpu_custom_call.1} parent=31 // pred_fallthru
          _
      $region32: #{tpu_custom_call.1} parent=5 // pred_fallthru
        _
      %p586 = scmp.le.s32.totalorder 2, %s15
      // Predicated region
      $region53: #{tpu_custom_call.1} parent=5 // pred_check
        %p587 = pneg %p586
      $region54: #{tpu_custom_call.1} parent=5 // pred_check_branch
        %589 = sbr.rel (%p587) target = $region56
      $region55: #{tpu_custom_call.1} parent=5 // pred_region
        %s590 = ssub.s32 %s15, 2
        // Predicated region
        $region57: #{tpu_custom_call.1} parent=55 // pred_check
          %p591 = pneg %p140
        $region58: #{tpu_custom_call.1} parent=55 // pred_check_branch
          %593 = sbr.rel (%p591) target = $region60
        $region59: #{tpu_custom_call.1} parent=55 // pred_region
          %p594 = scmp.lt.s32.totalorder %s26, 1
          %s595 = scalar_select %p594, %s26, 1
          %s596 = smul.addr %s595, 4
          %s597 = scalar_lea.vmem %s3, %s596
        $region60: #{tpu_custom_call.1} parent=55 // pred_fallthru
          _
      $region56: #{tpu_custom_call.1} parent=5 // pred_fallthru
        _
    $region6: #{tpu_custom_call.1} parent=1 // loop_footer
      %s19 = sadd.s32 1, %s15
    $region7: #{tpu_custom_call.1} parent=1 // loop_footer_branch
      %14 = sbr.rel target = $region3
    $region8: #{tpu_custom_call.1} parent=1 // loop_exit
      _
    %598 = vsyncpa [#allocation6], 1
    %s599 = scalar_lea.sflag [#allocation6], 1
    %600 = vsyncpa %s599, 1
    %601 = vsyncpa [#allocation8], 1
    %s602 = scalar_lea.sflag [#allocation8], 1
    %603 = vsyncpa %s602, 1

</llo_original>
